<compile_context>
chip_gen: v7x
topology: tpu7x:2x2x1
jax: 0.10.0
libtpu: 0.0.40
codegen_flags: <defaults>
</compile_context>

<pallas_src>
import functools
import math

import jax
import jax.numpy as jnp
from jax.experimental import pallas as pl
from jax.experimental.pallas import tpu as pltpu


def _latent_norm_kernel(x_ref, w1_ref, b1_ref, w2_ref, b2_ref, eps_ref,
                        z_ref, kld_ref, *, latent_dim, tile_m, m_total,
                        m_padded):
    i = pl.program_id(0)

    # Linear 1 + LeakyReLU(0.2)  (MXU, f32 accumulate)
    h = jnp.dot(x_ref[...], w1_ref[...],
                preferred_element_type=jnp.float32) + b1_ref[...]
    h = jnp.where(h >= 0, h, 0.2 * h)

    # Linear 2
    lat = jnp.dot(h, w2_ref[...],
                  preferred_element_type=jnp.float32) + b2_ref[...]

    mu = lat[:, :latent_dim]
    logvar = lat[:, latent_dim:]

    # Reparameterization: z = eps * std + mu.  Single exp per element; reuse
    # std*std as exp(logvar) for the KLD term (halves EUP work).
    std = jnp.exp(0.5 * logvar)
    var = std * std
    z_ref[...] = (eps_ref[...] * std + mu).astype(z_ref.dtype)

    # Per-block partial KLD: -0.5 * sum(1 + logvar - mu^2 - exp(logvar)).
    kld_elem = 1.0 + logvar - mu * mu - var
    if m_total != m_padded:  # mask rows added by padding (static branch)
        row = i * tile_m + jax.lax.broadcasted_iota(
            jnp.int32, (tile_m, latent_dim), 0)
        kld_elem = jnp.where(row < m_total, kld_elem, 0.0)
    kld_tile = -0.5 * jnp.sum(kld_elem)

    # Broadcast the scalar partial into a lane-aligned (1, 8, 128) tile; the
    # wrapper reads element [i, 0, 0] per block and reduces outside the kernel.
    # This keeps the grid axis "parallel" (no accumulator revisit).
    kld_ref[...] = jnp.full(kld_ref.shape, kld_tile, dtype=jnp.float32)


def latent_norm_forward(hidden_states, w1, b1, w2, b2, eps, *, tile_m=512):
    """hidden_states: [B, S, H]; returns (z [B, S, L], kld scalar)."""
    B, S, H = hidden_states.shape
    two_L = w1.shape[1]
    L = two_L // 2
    M = B * S

    # Row tile: multiple of 8 sublanes, no larger than the (8-padded) row count.
    tile_m = max(8, min(tile_m, pl.cdiv(M, 8) * 8))
    tile_m = (tile_m // 8) * 8
    M_pad = pl.cdiv(M, tile_m) * tile_m
    grid_m = M_pad // tile_m

    x2d = hidden_states.reshape(M, H)
    eps2d = eps.reshape(M, L)
    if M_pad != M:
        x2d = jnp.pad(x2d, ((0, M_pad - M), (0, 0)))
        eps2d = jnp.pad(eps2d, ((0, M_pad - M), (0, 0)))
    b1_2d = b1.reshape(1, two_L)
    b2_2d = b2.reshape(1, two_L)

    kernel = functools.partial(_latent_norm_kernel, latent_dim=L,
                               tile_m=tile_m, m_total=M, m_padded=M_pad)

    cost = pl.CostEstimate(
        flops=2 * M_pad * (H * two_L + two_L * two_L),
        transcendentals=M_pad * L,
        bytes_accessed=4 * (M_pad * (H + L + L)
                            + H * two_L + two_L * two_L + 2 * two_L),
    )

    z2d, kld_parts = pl.pallas_call(
        kernel,
        out_shape=(
            jax.ShapeDtypeStruct((M_pad, L), hidden_states.dtype),
            jax.ShapeDtypeStruct((grid_m, 8, 128), jnp.float32),
        ),
        grid_spec=pltpu.PrefetchScalarGridSpec(
            num_scalar_prefetch=0,
            grid=(grid_m,),
            in_specs=[
                pl.BlockSpec((tile_m, H), lambda i: (i, 0)),       # x rows
                pl.BlockSpec((H, two_L), lambda i: (0, 0)),        # w1
                pl.BlockSpec((1, two_L), lambda i: (0, 0)),        # b1
                pl.BlockSpec((two_L, two_L), lambda i: (0, 0)),    # w2
                pl.BlockSpec((1, two_L), lambda i: (0, 0)),        # b2
                pl.BlockSpec((tile_m, L), lambda i: (i, 0)),       # eps rows
            ],
            out_specs=[
                pl.BlockSpec((tile_m, L), lambda i: (i, 0)),       # z rows
                pl.BlockSpec((1, 8, 128), lambda i: (i, 0, 0)),    # kld partial
            ],
        ),
        compiler_params=pltpu.CompilerParams(
            dimension_semantics=("parallel",)),
        cost_estimate=cost,
    )(x2d, w1, b1_2d, w2, b2_2d, eps2d)

    z = z2d[:M].reshape(B, S, L)
    # gaussian_kld_norm: KLD / (mus.size(0) + 1e-8); mus.size(0) == B
    kld = kld_parts[:, 0, 0].sum() / (B + 1e-8)
    return z, kld


def init_linear_params(key, fan_in, fan_out):
    """Deterministic PyTorch-default-style Linear init."""
    kw, kb = jax.random.split(key)
    bound = 1.0 / math.sqrt(fan_in)
    # Stored transposed relative to torch (fan_in, fan_out) so kernel does x @ W.
    w = jax.random.uniform(kw, (fan_in, fan_out), jnp.float32, -bound, bound)
    b = jax.random.uniform(kb, (fan_out,), jnp.float32, -bound, bound)
    return w, b


if __name__ == "__main__":
    # Small shapes consistent with the module: [B, S, hidden_dim]
    B, S, hidden_dim, latent_dim = 2, 8, 32, 16

    root = jax.random.PRNGKey(0)
    kx, keps, k1, k2 = jax.random.split(root, 4)

    hidden_states = jax.random.normal(kx, (B, S, hidden_dim), jnp.float32)
    eps = jax.random.normal(keps, (B, S, latent_dim), jnp.float32)

    w1, b1 = init_linear_params(k1, hidden_dim, latent_dim * 2)
    w2, b2 = init_linear_params(k2, latent_dim * 2, latent_dim * 2)

    z, kld = latent_norm_forward(hidden_states, w1, b1, w2, b2, eps)
    jax.block_until_ready((z, kld))

    # Pure-JAX reference check
    h_ref = hidden_states.reshape(B * S, hidden_dim) @ w1 + b1
    h_ref = jnp.where(h_ref >= 0, h_ref, 0.2 * h_ref)
    lat_ref = h_ref @ w2 + b2
    mu_ref = lat_ref[:, :latent_dim]
    lv_ref = lat_ref[:, latent_dim:]
    z_ref = (eps.reshape(B * S, latent_dim) * jnp.exp(0.5 * lv_ref) + mu_ref
             ).reshape(B, S, latent_dim)
    kld_ref = (-0.5 * jnp.sum(1 + lv_ref - mu_ref ** 2 - jnp.exp(lv_ref))
               ) / (B + 1e-8)

    assert jnp.allclose(z, z_ref, atol=1e-5, rtol=1e-5)
    assert jnp.allclose(kld, kld_ref, atol=1e-4, rtol=1e-5)

    print("KERNEL_OK")
</pallas_src>

<mosaic_0001>
module attributes {stable_mosaic.version = 11 : i64} {
  func.func @_latent_norm_kernel(%arg0: i32, %arg1: memref<16x32xf32, #tpu.memory_space<vmem>>, %arg2: memref<32x32xf32, #tpu.memory_space<vmem>>, %arg3: memref<1x32xf32, #tpu.memory_space<vmem>>, %arg4: memref<32x32xf32, #tpu.memory_space<vmem>>, %arg5: memref<1x32xf32, #tpu.memory_space<vmem>>, %arg6: memref<16x16xf32, #tpu.memory_space<vmem>>, %arg7: memref<16x16xf32, #tpu.memory_space<vmem>>, %arg8: memref<1x8x128xf32, #tpu.memory_space<vmem>>) attributes {dimension_semantics = [#tpu.dimension_semantics<parallel>], iteration_bounds = array<i64: 1>, scalar_prefetch = 0 : i64, scratch_operands = 0 : i64, tpu.core_type = #tpu.core_type<tc>, window_params = [{transform_indices = @transform_0, window_bounds = array<i64: 16, 32>}, {pipeline_mode = #tpu.pipeline_mode<synchronous>, transform_indices = @transform_1, window_bounds = array<i64: 32, 32>}, {pipeline_mode = #tpu.pipeline_mode<synchronous>, transform_indices = @transform_2, window_bounds = array<i64: 1, 32>}, {pipeline_mode = #tpu.pipeline_mode<synchronous>, transform_indices = @transform_3, window_bounds = array<i64: 32, 32>}, {pipeline_mode = #tpu.pipeline_mode<synchronous>, transform_indices = @transform_4, window_bounds = array<i64: 1, 32>}, {transform_indices = @transform_5, window_bounds = array<i64: 16, 16>}, {transform_indices = @transform_6, window_bounds = array<i64: 16, 16>}, {transform_indices = @transform_7, window_bounds = array<i64: 1, 8, 128>}]} {
    %c0 = arith.constant 0 : index
    %c0_0 = arith.constant 0 : index
    %0 = vector.load %arg1[%c0, %c0_0] : memref<16x32xf32, #tpu.memory_space<vmem>>, vector<16x32xf32>
    %c0_1 = arith.constant 0 : index
    %c0_2 = arith.constant 0 : index
    %1 = vector.load %arg2[%c0_1, %c0_2] : memref<32x32xf32, #tpu.memory_space<vmem>>, vector<32x32xf32>
    %cst = arith.constant dense<0.000000e+00> : vector<16x32xf32>
    %2 = tpu.matmul %0, %1, %cst {dimension_numbers = #tpu.dot_dimension_numbers<[1], [0], [0], [1], [0, 0, 1, 1], [], []>} : vector<16x32xf32>, vector<32x32xf32>, vector<16x32xf32> -> vector<16x32xf32>
    %c0_3 = arith.constant 0 : index
    %c0_4 = arith.constant 0 : index
    %3 = vector.load %arg3[%c0_3, %c0_4] : memref<1x32xf32, #tpu.memory_space<vmem>>, vector<1x32xf32>
    %4 = vector.broadcast %3 : vector<1x32xf32> to vector<16x32xf32>
    %5 = arith.addf %2, %4 : vector<16x32xf32>
    %cst_5 = arith.constant 0.000000e+00 : f32
    %6 = vector.broadcast %cst_5 : f32 to vector<16x32xf32>
    %7 = arith.cmpf oge, %5, %6 : vector<16x32xf32>
    %cst_6 = arith.constant 2.000000e-01 : f32
    %8 = vector.broadcast %cst_6 : f32 to vector<16x32xf32>
    %9 = arith.mulf %8, %5 : vector<16x32xf32>
    %10 = arith.select %7, %5, %9 : vector<16x32xi1>, vector<16x32xf32>
    %c0_7 = arith.constant 0 : index
    %c0_8 = arith.constant 0 : index
    %11 = vector.load %arg4[%c0_7, %c0_8] : memref<32x32xf32, #tpu.memory_space<vmem>>, vector<32x32xf32>
    %cst_9 = arith.constant dense<0.000000e+00> : vector<16x32xf32>
    %12 = tpu.matmul %10, %11, %cst_9 {dimension_numbers = #tpu.dot_dimension_numbers<[1], [0], [0], [1], [0, 0, 1, 1], [], []>} : vector<16x32xf32>, vector<32x32xf32>, vector<16x32xf32> -> vector<16x32xf32>
    %c0_10 = arith.constant 0 : index
    %c0_11 = arith.constant 0 : index
    %13 = vector.load %arg5[%c0_10, %c0_11] : memref<1x32xf32, #tpu.memory_space<vmem>>, vector<1x32xf32>
    %14 = vector.broadcast %13 : vector<1x32xf32> to vector<16x32xf32>
    %15 = arith.addf %12, %14 : vector<16x32xf32>
    %16 = vector.extract_strided_slice %15 {offsets = [0, 0], sizes = [16, 16], strides = [1, 1]} : vector<16x32xf32> to vector<16x16xf32>
    %17 = vector.extract_strided_slice %15 {offsets = [0, 16], sizes = [16, 16], strides = [1, 1]} : vector<16x32xf32> to vector<16x16xf32>
    %cst_12 = arith.constant 5.000000e-01 : f32
    %18 = vector.broadcast %cst_12 : f32 to vector<16x16xf32>
    %19 = arith.mulf %18, %17 : vector<16x16xf32>
    %20 = math.exp %19 : vector<16x16xf32>
    %21 = arith.mulf %20, %20 : vector<16x16xf32>
    %c0_13 = arith.constant 0 : index
    %c0_14 = arith.constant 0 : index
    %22 = vector.load %arg6[%c0_13, %c0_14] : memref<16x16xf32, #tpu.memory_space<vmem>>, vector<16x16xf32>
    %23 = arith.mulf %22, %20 : vector<16x16xf32>
    %24 = arith.addf %23, %16 : vector<16x16xf32>
    %c0_15 = arith.constant 0 : index
    %c0_16 = arith.constant 0 : index
    %25 = vector.load %arg7[%c0_15, %c0_16] : memref<16x16xf32, #tpu.memory_space<vmem>>, vector<16x16xf32>
    tpu.vector_store %arg7[%c0_15, %c0_16], %24 {strides = array<i32>} : memref<16x16xf32, #tpu.memory_space<vmem>>, vector<16x16xf32>,
    %cst_17 = arith.constant 1.000000e+00 : f32
    %26 = vector.broadcast %cst_17 : f32 to vector<16x16xf32>
    %27 = arith.addf %26, %17 : vector<16x16xf32>
    %28 = arith.mulf %16, %16 : vector<16x16xf32>
    %29 = arith.subf %27, %28 : vector<16x16xf32>
    %30 = arith.subf %29, %21 : vector<16x16xf32>
    %31 = vector.shape_cast %30 : vector<16x16xf32> to vector<1x16x16xf32>
    %cst_18 = arith.constant dense<0.000000e+00> : vector<1xf32>
    %32 = vector.multi_reduction <add>, %31, %cst_18 [1, 2] : vector<1x16x16xf32> to vector<1xf32>
    %33 = vector.shape_cast %32 : vector<1xf32> to vector<1x1x1xf32>
    %34 = vector.extract %33[0, 0, 0] : f32 from vector<1x1x1xf32>
    %cst_19 = arith.constant -5.000000e-01 : f32
    %35 = arith.mulf %cst_19, %34 : f32
    %36 = vector.broadcast %35 : f32 to vector<1x8x128xf32>
    %c0_20 = arith.constant 0 : index
    %c0_21 = arith.constant 0 : index
    %c0_22 = arith.constant 0 : index
    %37 = vector.load %arg8[%c0_20, %c0_21, %c0_22] : memref<1x8x128xf32, #tpu.memory_space<vmem>>, vector<1x8x128xf32>
    tpu.vector_store %arg8[%c0_20, %c0_21, %c0_22], %36 {strides = array<i32>} : memref<1x8x128xf32, #tpu.memory_space<vmem>>, vector<1x8x128xf32>,
    return
  }
  func.func @transform_0(%arg0: i32) -> (i32, i32) {
    %c0_i32 = arith.constant 0 : i32
    %c0_i32_0 = arith.constant 0 : i32
    return %arg0, %c0_i32 : i32, i32
  }
  func.func @transform_1(%arg0: i32) -> (i32, i32) {
    %c0_i32 = arith.constant 0 : i32
    %c0_i32_0 = arith.constant 0 : i32
    %c0_i32_1 = arith.constant 0 : i32
    return %c0_i32, %c0_i32_0 : i32, i32
  }
  func.func @transform_2(%arg0: i32) -> (i32, i32) {
    %c0_i32 = arith.constant 0 : i32
    %c0_i32_0 = arith.constant 0 : i32
    %c0_i32_1 = arith.constant 0 : i32
    return %c0_i32, %c0_i32_0 : i32, i32
  }
  func.func @transform_3(%arg0: i32) -> (i32, i32) {
    %c0_i32 = arith.constant 0 : i32
    %c0_i32_0 = arith.constant 0 : i32
    %c0_i32_1 = arith.constant 0 : i32
    return %c0_i32, %c0_i32_0 : i32, i32
  }
  func.func @transform_4(%arg0: i32) -> (i32, i32) {
    %c0_i32 = arith.constant 0 : i32
    %c0_i32_0 = arith.constant 0 : i32
    %c0_i32_1 = arith.constant 0 : i32
    return %c0_i32, %c0_i32_0 : i32, i32
  }
  func.func @transform_5(%arg0: i32) -> (i32, i32) {
    %c0_i32 = arith.constant 0 : i32
    %c0_i32_0 = arith.constant 0 : i32
    return %arg0, %c0_i32 : i32, i32
  }
  func.func @transform_6(%arg0: i32) -> (i32, i32) {
    %c0_i32 = arith.constant 0 : i32
    %c0_i32_0 = arith.constant 0 : i32
    return %arg0, %c0_i32 : i32, i32
  }
  func.func @transform_7(%arg0: i32) -> (i32, i32, i32) {
    %c0_i32 = arith.constant 0 : i32
    %c0_i32_0 = arith.constant 0 : i32
    %c0_i32_1 = arith.constant 0 : i32
    return %arg0, %c0_i32, %c0_i32_0 : i32, i32, i32
  }
}

</mosaic_0001>

<llo_original>
// kernel: tpu_custom_call.1
$region0: #{tpu_custom_call.1}
  #allocation0 [shape = 'u32[]', space=smem, size = 0x4, offset = 0x4, fixed_abs, tag = 'smem constant byte address 0x4 - core index']
  #allocation1 [shape = 'u32[144,128]{1,0:T(1,128)}', space=vmem, size = 0x12000, scoped, tag = 'internal scratch']
  %s0 = inlined_call_operand.hbm [shape: f32[16,32], index: 0, kind: input, shape index: {}]
  %s1 = inlined_call_operand.hbm [shape: f32[32,32], index: 1, kind: input, shape index: {}]
  %s2 = inlined_call_operand.vmem [shape: f32[1,32], index: 2, kind: input, shape index: {}]
  %s3 = inlined_call_operand.hbm [shape: f32[32,32], index: 3, kind: input, shape index: {}]
  %s4 = inlined_call_operand.vmem [shape: f32[1,32], index: 4, kind: input, shape index: {}]
  %s5 = inlined_call_operand.vmem [shape: f32[16,16], index: 5, kind: input, shape index: {}]
  %s6 = inlined_call_operand.hbm [shape: f32[16,16], index: 6, kind: output, shape index: {0}]
  %s7 = inlined_call_operand.hbm [shape: f32[1,8,128], index: 7, kind: output, shape index: {1}]
  %8 = xla_tuple %s6, %s7
  %s9 = sld [smem:[#allocation0]]
  $region54: #{tpu_custom_call.1} parent=0
    _
  %s11 = ssub.s32 1, %s9
  %s12 = scalar_select 0, %s11, %s9
  $region1: #{tpu_custom_call.1} parent=0
    #allocation2 [shape = 'u8[8192]{0}', space=vmem, size = 0x2000, scoped, tag = 'input window, operand 0, single buffered']
    #allocation3 [shape = 's32[1]{0}', space=sflag, size = 0x4, scoped, tag = 'scoped memory for tpu_custom_call.1']
    #allocation4 [shape = 's32[1]{0}', space=sflag, size = 0x4, scoped, tag = 'scoped memory for tpu_custom_call.1']
    #allocation5 [shape = 'u8[16384]{0}', space=vmem, size = 0x4000, scoped, tag = 'input window, operand 1, single buffered']
    #allocation6 [shape = 's32[1]{0}', space=sflag, size = 0x4, scoped, tag = 'scoped memory for tpu_custom_call.1']
    #allocation7 [shape = 'u8[16384]{0}', space=vmem, size = 0x4000, scoped, tag = 'input window, operand 3, single buffered']
    #allocation8 [shape = 'u8[8192]{0}', space=vmem, size = 0x2000, scoped, tag = 'output window, operand 0, single buffered']
    #allocation9 [shape = 'u8[4096]{0}', space=vmem, size = 0x1000, scoped, tag = 'output window, operand 1, single buffered']
    #allocation10 [shape = 's32[1]{0}', space=sflag, size = 0x4, scoped, tag = 'scoped memory for tpu_custom_call.1']
    %13 = vsyncpa [#allocation3], 0
    %14 = vsyncpa [#allocation6], 0
    %15 = vsyncpa [#allocation4], 0
    %16 = vsyncpa [#allocation10], 0
    // Predicated region
    $region2: #{tpu_custom_call.1} parent=1 // pred_check
      _
    $region3: #{tpu_custom_call.1} parent=1 // pred_check_branch
      %18 = sbr.rel (0) target = $region5
    $region4: #{tpu_custom_call.1} parent=1 // pred_region
      %s20 = ssub.s32 256, 256
      %21 = vsyncadd [#allocation3], %s20
      %s22 = sshll.u32 [#allocation2], 4
      %s23 = int_to_ptr.vmem [resolvable:$true] %s22
      %28 = dma.hbm_to_vmem [thread:$0]  %s0, 256, %s23, [#allocation3], 128, 128, 8
    $region5: #{tpu_custom_call.1} parent=1 // pred_fallthru
      _
    // Predicated region
    $region6: #{tpu_custom_call.1} parent=1 // pred_check
      _
    $region7: #{tpu_custom_call.1} parent=1 // pred_check_branch
      %30 = sbr.rel (0) target = $region9
    $region8: #{tpu_custom_call.1} parent=1 // pred_region
      %s32 = ssub.s32 512, 512
      %33 = vsyncadd [#allocation6], %s32
      %s34 = sshll.u32 [#allocation5], 4
      %s35 = int_to_ptr.vmem [resolvable:$true] %s34
      %40 = dma.hbm_to_vmem [thread:$0]  %s1, 512, %s35, [#allocation6], 128, 128, 8
    $region9: #{tpu_custom_call.1} parent=1 // pred_fallthru
      _
    // Predicated region
    $region10: #{tpu_custom_call.1} parent=1 // pred_check
      _
    $region11: #{tpu_custom_call.1} parent=1 // pred_check_branch
      %42 = sbr.rel (0) target = $region13
    $region12: #{tpu_custom_call.1} parent=1 // pred_region
      _
    $region13: #{tpu_custom_call.1} parent=1 // pred_fallthru
      _
    // Predicated region
    $region14: #{tpu_custom_call.1} parent=1 // pred_check
      _
    $region15: #{tpu_custom_call.1} parent=1 // pred_check_branch
      %44 = sbr.rel (0) target = $region17
    $region16: #{tpu_custom_call.1} parent=1 // pred_region
      %s46 = ssub.s32 512, 512
      %47 = vsyncadd [#allocation6], %s46
      %s48 = sshll.u32 [#allocation7], 4
      %s49 = int_to_ptr.vmem [resolvable:$true] %s48
      %54 = dma.hbm_to_vmem [thread:$0]  %s3, 512, %s49, [#allocation6], 128, 128, 8
    $region17: #{tpu_custom_call.1} parent=1 // pred_fallthru
      _
    // Predicated region
    $region18: #{tpu_custom_call.1} parent=1 // pred_check
      _
    $region19: #{tpu_custom_call.1} parent=1 // pred_check_branch
      %56 = sbr.rel (0) target = $region21
    $region20: #{tpu_custom_call.1} parent=1 // pred_region
      _
    $region21: #{tpu_custom_call.1} parent=1 // pred_fallthru
      _
    // Predicated region
    $region22: #{tpu_custom_call.1} parent=1 // pred_check
      _
    $region23: #{tpu_custom_call.1} parent=1 // pred_check_branch
      %58 = sbr.rel (0) target = $region25
    $region24: #{tpu_custom_call.1} parent=1 // pred_region
      _
    $region25: #{tpu_custom_call.1} parent=1 // pred_fallthru
      _
    // Predicated region
    $region26: #{tpu_custom_call.1} parent=1 // pred_check
      _
    $region27: #{tpu_custom_call.1} parent=1 // pred_check_branch
      %60 = sbr.rel (0) target = $region29
    $region28: #{tpu_custom_call.1} parent=1 // pred_region
      %61 = dma.done [#allocation3], 256
    $region29: #{tpu_custom_call.1} parent=1 // pred_fallthru
      _
    // Predicated region
    $region30: #{tpu_custom_call.1} parent=1 // pred_check
      _
    $region31: #{tpu_custom_call.1} parent=1 // pred_check_branch
      %63 = sbr.rel (0) target = $region33
    $region32: #{tpu_custom_call.1} parent=1 // pred_region
      %64 = dma.done [#allocation6], 512
    $region33: #{tpu_custom_call.1} parent=1 // pred_fallthru
      _
    // Predicated region
    $region34: #{tpu_custom_call.1} parent=1 // pred_check
      _
    $region35: #{tpu_custom_call.1} parent=1 // pred_check_branch
      %66 = sbr.rel (0) target = $region37
    $region36: #{tpu_custom_call.1} parent=1 // pred_region
      %67 = dma.done [#allocation6], 512
    $region37: #{tpu_custom_call.1} parent=1 // pred_fallthru
      _
    %v68 = vld [vmem:[#allocation2] sm:$0xff]
    %v69 = vld [vmem:[#allocation2 + $0x8] sm:$0xff]
    %v70 = vld [vmem:[#allocation5] sm:$0xff]
    %v71 = vld [vmem:[#allocation5 + $0x8] sm:$0xff]
    %v72 = vld [vmem:[#allocation5 + $0x10] sm:$0xff]
    %v73 = vld [vmem:[#allocation5 + $0x18] sm:$0xff]
    %v74 = vld [vmem:[%s2] sm:$0x1]
    %v76 = vlaneseq
    %v77 = vshrl.u32 %v76, 7
    %v78 = vsub.s32 0, %v77
    %v79 = vrot.slane %v74, %v78
    %vm81 = vcmask 261120
    %v83 = vsel %vm81, %v68, 0
    %v86 = vsel %vm81, %v69, 0
    %88 = vmatprep.subr.mxu0 0.0
    %89 = vmatpush1.msra.mxu0 %v70
    %90 = vmatprep.subr.mxu0 0.0
    %91 = vmatpush1.msra.mxu0 %v71
    %92 = vmatprep.subr.mxu0 0.0
    %93 = vmatpush1.msra.mxu0 %v72
    %94 = vmatprep.subr.mxu0 0.0
    %95 = vmatpush1.msra.mxu0 %v73
    %96 = vmatprep.subr.mxu0 0.0
    %97 = vmatpush1.msra.mxu0 0.0
    %98 = vmatprep.subr.mxu0 0.0
    %99 = vmatpush1.msra.mxu0 0.0
    %100 = vmatprep.subr.mxu0 0.0
    %101 = vmatpush1.msra.mxu0 0.0
    %102 = vmatprep.subr.mxu0 0.0
    %103 = vmatpush1.msra.mxu0 0.0
    %104 = vmatprep.subr.mxu0 0.0
    %105 = vmatpush1.msra.mxu0 0.0
    %106 = vmatprep.subr.mxu0 0.0
    %107 = vmatpush1.msra.mxu0 0.0
    %108 = vmatprep.subr.mxu0 0.0
    %109 = vmatpush1.msra.mxu0 0.0
    %110 = vmatprep.subr.mxu0 0.0
    %111 = vmatpush1.msra.mxu0 0.0
    %112 = vmatprep.subr.mxu0 0.0
    %113 = vmatpush1.msra.mxu0 0.0
    %114 = vmatprep.subr.mxu0 0.0
    %115 = vmatpush1.msra.mxu0 0.0
    %116 = vmatprep.subr.mxu0 0.0
    %117 = vmatpush1.msra.mxu0 0.0
    %118 = vmatprep.subr.mxu0 0.0
    %119 = vmatpush1.msra.mxu0 0.0
    %120 = vmatprep.subr.mxu0 0.0
    %121 = vmatpush1.msra.mxu0 0.0
    %122 = vmatprep.subr.mxu0 0.0
    %123 = vmatpush1.msra.mxu0 0.0
    %124 = vmatprep.subr.mxu0 0.0
    %125 = vmatpush1.msra.mxu0 0.0
    %126 = vmatprep.subr.mxu0 0.0
    %127 = vmatpush1.msra.mxu0 0.0
    %128 = vmatprep.subr.mxu0 0.0
    %129 = vmatpush1.msra.mxu0 0.0
    %130 = vmatprep.subr.mxu0 0.0
    %131 = vmatpush1.msra.mxu0 0.0
    %132 = vmatprep.subr.mxu0 0.0
    %133 = vmatpush1.msra.mxu0 0.0
    %134 = vmatprep.subr.mxu0 0.0
    %135 = vmatpush1.msra.mxu0 0.0
    %136 = vmatprep.subr.mxu0 0.0
    %137 = vmatpush1.msra.mxu0 0.0
    %138 = vmatprep.subr.mxu0 0.0
    %139 = vmatpush1.msra.mxu0 0.0
    %140 = vmatprep.subr.mxu0 0.0
    %141 = vmatpush1.msra.mxu0 0.0
    %142 = vmatprep.subr.mxu0 0.0
    %143 = vmatpush1.msra.mxu0 0.0
    %144 = vmatprep.subr.mxu0 0.0
    %145 = vmatpush1.msra.mxu0 0.0
    %146 = vmatprep.subr.mxu0 0.0
    %147 = vmatpush1.msra.mxu0 0.0
    %148 = vmatprep.subr.mxu0 0.0
    %149 = vmatpush1.msra.mxu0 0.0
    %150 = vmatprep.subr.mxu0 0.0
    %151 = vmatpush1.msra.mxu0 0.0
    %152 = vmatprep.mubr.f32.mxu0 0.0
    %153 = vmatmul.mubr.f32.gmra.mrb[0].mxu0 %v83
    %v154 = vpop.f32.mrb[0].mxu0
    %v155 = vadd.f32 %v79, %v154
    %v156 = vpop.f32.mrb[0].mxu0
    %157 = vmatprep.mubr.f32.mxu0 0.0
    %158 = vmatmul.mubr.f32.gmra.mrb[0].mxu0 %v86
    %v159 = vpop.f32.mrb[0].mxu0
    %v160 = vadd.f32 %v79, %v159
    %v161 = vpop.f32.mrb[0].mxu0
    %162 = vdwg.mxu0
    %vm163 = vcmp.ge.f32.partialorder %v155, 0.0
    %vm164 = vcmp.ge.f32.partialorder %v160, 0.0
    %v165 = vmul.f32 %v155, 0.2
    %v166 = vmul.f32 %v160, 0.2
    %v167 = vsel %vm163, %v155, %v165
    %v168 = vsel %vm164, %v160, %v166
    %v169 = vld [vmem:[#allocation7] sm:$0xff]
    %v170 = vld [vmem:[#allocation7 + $0x8] sm:$0xff]
    %v171 = vld [vmem:[#allocation7 + $0x10] sm:$0xff]
    %v172 = vld [vmem:[#allocation7 + $0x18] sm:$0xff]
    %v173 = vld [vmem:[%s4] sm:$0x1]
    %v175 = vlaneseq
    %v176 = vshrl.u32 %v175, 7
    %v177 = vsub.s32 0, %v176
    %v178 = vrot.slane %v173, %v177
    %v181 = vsel %vm81, %v167, 0
    %v184 = vsel %vm81, %v168, 0
    %186 = vmatprep.subr.mxu0 0.0
    %187 = vmatpush1.msra.mxu0 %v169
    %188 = vmatprep.subr.mxu0 0.0
    %189 = vmatpush1.msra.mxu0 %v170
    %190 = vmatprep.subr.mxu0 0.0
    %191 = vmatpush1.msra.mxu0 %v171
    %192 = vmatprep.subr.mxu0 0.0
    %193 = vmatpush1.msra.mxu0 %v172
    %194 = vmatprep.subr.mxu0 0.0
    %195 = vmatpush1.msra.mxu0 0.0
    %196 = vmatprep.subr.mxu0 0.0
    %197 = vmatpush1.msra.mxu0 0.0
    %198 = vmatprep.subr.mxu0 0.0
    %199 = vmatpush1.msra.mxu0 0.0
    %200 = vmatprep.subr.mxu0 0.0
    %201 = vmatpush1.msra.mxu0 0.0
    %202 = vmatprep.subr.mxu0 0.0
    %203 = vmatpush1.msra.mxu0 0.0
    %204 = vmatprep.subr.mxu0 0.0
    %205 = vmatpush1.msra.mxu0 0.0
    %206 = vmatprep.subr.mxu0 0.0
    %207 = vmatpush1.msra.mxu0 0.0
    %208 = vmatprep.subr.mxu0 0.0
    %209 = vmatpush1.msra.mxu0 0.0
    %210 = vmatprep.subr.mxu0 0.0
    %211 = vmatpush1.msra.mxu0 0.0
    %212 = vmatprep.subr.mxu0 0.0
    %213 = vmatpush1.msra.mxu0 0.0
    %214 = vmatprep.subr.mxu0 0.0
    %215 = vmatpush1.msra.mxu0 0.0
    %216 = vmatprep.subr.mxu0 0.0
    %217 = vmatpush1.msra.mxu0 0.0
    %218 = vmatprep.subr.mxu0 0.0
    %219 = vmatpush1.msra.mxu0 0.0
    %220 = vmatprep.subr.mxu0 0.0
    %221 = vmatpush1.msra.mxu0 0.0
    %222 = vmatprep.subr.mxu0 0.0
    %223 = vmatpush1.msra.mxu0 0.0
    %224 = vmatprep.subr.mxu0 0.0
    %225 = vmatpush1.msra.mxu0 0.0
    %226 = vmatprep.subr.mxu0 0.0
    %227 = vmatpush1.msra.mxu0 0.0
    %228 = vmatprep.subr.mxu0 0.0
    %229 = vmatpush1.msra.mxu0 0.0
    %230 = vmatprep.subr.mxu0 0.0
    %231 = vmatpush1.msra.mxu0 0.0
    %232 = vmatprep.subr.mxu0 0.0
    %233 = vmatpush1.msra.mxu0 0.0
    %234 = vmatprep.subr.mxu0 0.0
    %235 = vmatpush1.msra.mxu0 0.0
    %236 = vmatprep.subr.mxu0 0.0
    %237 = vmatpush1.msra.mxu0 0.0
    %238 = vmatprep.subr.mxu0 0.0
    %239 = vmatpush1.msra.mxu0 0.0
    %240 = vmatprep.subr.mxu0 0.0
    %241 = vmatpush1.msra.mxu0 0.0
    %242 = vmatprep.subr.mxu0 0.0
    %243 = vmatpush1.msra.mxu0 0.0
    %244 = vmatprep.subr.mxu0 0.0
    %245 = vmatpush1.msra.mxu0 0.0
    %246 = vmatprep.subr.mxu0 0.0
    %247 = vmatpush1.msra.mxu0 0.0
    %248 = vmatprep.subr.mxu0 0.0
    %249 = vmatpush1.msra.mxu0 0.0
    %250 = vmatprep.mubr.f32.mxu0 0.0
    %251 = vmatmul.mubr.f32.gmra.mrb[0].mxu0 %v181
    %v252 = vpop.f32.mrb[0].mxu0
    %v253 = vadd.f32 %v178, %v252
    %v254 = vpop.f32.mrb[0].mxu0
    %255 = vmatprep.mubr.f32.mxu0 0.0
    %256 = vmatmul.mubr.f32.gmra.mrb[0].mxu0 %v184
    %v257 = vpop.f32.mrb[0].mxu0
    %v258 = vadd.f32 %v178, %v257
    %v259 = vpop.f32.mrb[0].mxu0
    %260 = vdwg.mxu0
    %v261 = vmul.f32 %v253, 0.5
    %v262 = vmul.f32 %v258, 0.5
    %v263 = vmul.f32 %v261, 1.442695
    %v264 = vpow.pop %v263
    %v265 = vmul.f32 %v262, 1.442695
    %v266 = vpow.pop %v265
    %v267 = vmul.f32 %v264, %v264
    %v268 = vmul.f32 %v266, %v266
    %v269 = vld [vmem:[%s5] sm:$0xff]
    %v270 = vld [vmem:[%s5 + $0x8] sm:$0xff]
    %273 = vrot.lane.b32.xlu0 %v264, 112
    %v274 = vpop.permute.xlu0 %273
    %275 = vrot.lane.b32.xlu0 %v266, 112
    %v276 = vpop.permute.xlu0 %275
    %v279 = vmul.f32 %v269, %v274
    %v280 = vmul.f32 %v270, %v276
    %v281 = vadd.f32 %v279, %v253
    %v282 = vadd.f32 %v280, %v258
    %vm283 = vcmask 130048
    %284 = vst.msk [vmem:[#allocation8] sm:$0xff] %vm283, %v281
    %285 = vst.msk [vmem:[#allocation8 + $0x8] sm:$0xff] %vm283, %v282
    %v286 = vadd.f32 %v253, 1.0
    %v287 = vadd.f32 %v258, 1.0
    %v288 = vmul.f32 %v253, %v253
    %v289 = vmul.f32 %v258, %v258
    %292 = vrot.lane.b32.xlu0 %v288, 16
    %v293 = vpop.permute.xlu0 %292
    %294 = vrot.lane.b32.xlu0 %v289, 16
    %v295 = vpop.permute.xlu0 %294
    %v298 = vsub.f32 %v286, %v293
    %v299 = vsub.f32 %v287, %v295
    %v300 = vsub.f32 %v298, %v267
    %v301 = vsub.f32 %v299, %v268
    %304 = vrot.lane.b32.xlu0 %v300, 112
    %v305 = vpop.permute.xlu0 %304
    %306 = vrot.lane.b32.xlu0 %v301, 112
    %v307 = vpop.permute.xlu0 %306
    %v310 = vsel %vm283, %v305, 0.0
    %v311 = vsel %vm283, %v307, 0.0
    %v312 = vadd.f32 %v310, %v311
    %313 = vadd.xlane.f32.xlu0 %v312
    %v314 = vpop.xlane.xlu0 %313
    %v315 = vrot.slane %v314, 4
    %v316 = vadd.f32 %v314, %v315
    %v317 = vrot.slane %v316, 2
    %v318 = vadd.f32 %v316, %v317
    %v319 = vrot.slane %v318, 1
    %v320 = vadd.f32 %v318, %v319
    %s321 = vtos %v320
    %s322 = smul.f32 %s321, -0.5
    %v323 = vstv %s322
    %324 = vst [vmem:[#allocation9] sm:$0xff] %v323
    // Predicated region
    $region38: #{tpu_custom_call.1} parent=1 // pred_check
      _
    $region39: #{tpu_custom_call.1} parent=1 // pred_check_branch
      %326 = sbr.rel (0) target = $region41
    $region40: #{tpu_custom_call.1} parent=1 // pred_region
      %s328 = ssub.s32 256, 256
      %329 = vsyncadd [#allocation4], %s328
      %s330 = sshll.u32 [#allocation8], 4
      %s331 = int_to_ptr.vmem [resolvable:$true] %s330
      %336 = dma.vmem_to_hbm [thread:$0]  %s331, 256, %s6, [#allocation4], 128, 128, 8
    $region41: #{tpu_custom_call.1} parent=1 // pred_fallthru
      _
    // Predicated region
    $region42: #{tpu_custom_call.1} parent=1 // pred_check
      _
    $region43: #{tpu_custom_call.1} parent=1 // pred_check_branch
      %338 = sbr.rel (0) target = $region45
    $region44: #{tpu_custom_call.1} parent=1 // pred_region
      %s340 = ssub.s32 128, 128
      %341 = vsyncadd [#allocation10], %s340
      %s343 = sshll.u32 [#allocation9], 4
      %s344 = int_to_ptr.vmem [resolvable:$true] %s343
      %346 = dma.vmem_to_hbm [thread:$0]  %s344, 128, %s7, [#allocation10]
    $region45: #{tpu_custom_call.1} parent=1 // pred_fallthru
      _
    // Predicated region
    $region46: #{tpu_custom_call.1} parent=1 // pred_check
      _
    $region47: #{tpu_custom_call.1} parent=1 // pred_check_branch
      %348 = sbr.rel (0) target = $region49
    $region48: #{tpu_custom_call.1} parent=1 // pred_region
      %349 = dma.done [#allocation4], 256
    $region49: #{tpu_custom_call.1} parent=1 // pred_fallthru
      _
    // Predicated region
    $region50: #{tpu_custom_call.1} parent=1 // pred_check
      _
    $region51: #{tpu_custom_call.1} parent=1 // pred_check_branch
      %351 = sbr.rel (0) target = $region53
    $region52: #{tpu_custom_call.1} parent=1 // pred_region
      %352 = dma.done [#allocation10], 128
    $region53: #{tpu_custom_call.1} parent=1 // pred_fallthru
      _
    %353 = vsyncpa [#allocation3], 1
    %354 = vsyncpa [#allocation6], 1
    %355 = vsyncpa [#allocation4], 1
    %356 = vsyncpa [#allocation10], 1

</llo_original>
